<compile_context>
chip_gen: v7x
topology: tpu7x:2x2x1
jax: 0.10.0
libtpu: 0.0.40
codegen_flags: <defaults>
</compile_context>

<pallas_src>
import functools

import jax
import jax.numpy as jnp
import numpy as np
from jax.experimental import pallas as pl
from jax.experimental.pallas import tpu as pltpu

_LANE = 128
_SUBLANE = 8


def _loss_kernel(x_ref, t_ref, out_ref, ce_acc, tp_acc, dn_acc, *, num_classes):
    s = pl.program_id(1)

    @pl.when(s == 0)
    def _init():
        ce_acc[...] = jnp.zeros_like(ce_acc)
        tp_acc[...] = jnp.zeros_like(tp_acc)
        dn_acc[...] = jnp.zeros_like(dn_acc)

    # Per-class spatial planes: each is a dense (tile_rows, 128) tile, so the
    # whole class reduction below is elementwise full-vreg VPU work.
    def xc(c):
        return x_ref[0, c].astype(jnp.float32)

    def tc(c):
        return t_ref[0, c].astype(jnp.float32)

    # log-sum-exp over the class axis, per pixel (unrolled elementwise loop).
    m = xc(0)
    for c in range(1, num_classes):
        m = jnp.maximum(m, xc(c))
    se = jnp.exp(xc(0) - m)
    for c in range(1, num_classes):
        se = se + jnp.exp(xc(c) - m)
    lse = m + jnp.log(se)

    # sum_c t, sum_c x, sum_c t*x  (elementwise over class planes).
    t_sum = tc(0)
    x_sum = xc(0)
    tx = tc(0) * xc(0)
    for c in range(1, num_classes):
        t_c = tc(c)
        x_c = xc(c)
        t_sum = t_sum + t_c
        x_sum = x_sum + x_c
        tx = tx + t_c * x_c

    # Dense full-tile accumulators (unmasked vreg adds).
    ce_acc[...] += lse * t_sum - tx      # CE numerator: -sum_c t * log_softmax(x)
    tp_acc[...] += tx                    # dice intersection
    dn_acc[...] += x_sum + t_sum         # dice denominator piece

    @pl.when(s == pl.num_programs(1) - 1)
    def _finalize():
        # Per-batch, per-lane partial sums (cross-sublane reduce once/batch).
        out_ref[0, 0:1, :] = jnp.sum(ce_acc[...], axis=0, keepdims=True)
        out_ref[0, 1:2, :] = jnp.sum(tp_acc[...], axis=0, keepdims=True)
        out_ref[0, 2:3, :] = jnp.sum(dn_acc[...], axis=0, keepdims=True)


def _pick_tile_rows(rows8, c, itemsize, budget_bytes=4 << 20):
    """Largest row-tile (multiple of 8) with block bytes <= budget, capped at rows8."""
    by_budget = (budget_bytes // (c * _LANE * itemsize)) // _SUBLANE * _SUBLANE
    return int(min(max(by_budget, _SUBLANE), rows8))


def my_loss(logits_nchw, target_nchw, *, eps=1.0, tile_rows=None):
    """0.5*CE(soft targets) + 0.5*Dice, matching MyLoss.forward. Inputs NCHW."""
    n, c, h, w = logits_nchw.shape
    assert target_nchw.shape == logits_nchw.shape
    hw = h * w
    itemsize = jnp.dtype(logits_nchw.dtype).itemsize

    rows = pl.cdiv(hw, _LANE)                                  # spatial rows of 128
    rows8 = ((rows + _SUBLANE - 1) // _SUBLANE) * _SUBLANE     # round up to sublanes

    if tile_rows is None:
        tile_rows = _pick_tile_rows(rows8, c, itemsize)
    assert tile_rows % _SUBLANE == 0, "tile_rows must be a multiple of 8"
    tile_rows = min(tile_rows, rows8)

    padded_rows = ((rows + tile_rows - 1) // tile_rows) * tile_rows
    padded_hw = padded_rows * _LANE
    grid_s = padded_rows // tile_rows

    # Metadata reshape + zero-pad of the spatial tail only.  Zero logits and
    # zero targets contribute exactly 0 to every accumulated partial sum
    # (lse*0 - 0, 0, 0), so no in-kernel masking is needed.
    x = logits_nchw.reshape(n, c, hw)
    t = target_nchw.reshape(n, c, hw)
    if padded_hw != hw:
        pad = padded_hw - hw
        x = jnp.pad(x, ((0, 0), (0, 0), (0, pad)))
        t = jnp.pad(t, ((0, 0), (0, 0), (0, pad)))
    x = x.reshape(n, c, padded_rows, _LANE)
    t = t.reshape(n, c, padded_rows, _LANE)

    kernel = functools.partial(_loss_kernel, num_classes=c)

    in_bytes = 2 * n * c * padded_hw * itemsize
    out_bytes = n * 3 * _LANE * 4
    cost = pl.CostEstimate(
        flops=12 * n * c * padded_hw,
        transcendentals=(c + 1) * n * padded_hw,
        bytes_accessed=in_bytes + out_bytes,
    )

    partials = pl.pallas_call(
        kernel,
        out_shape=jax.ShapeDtypeStruct((n, 3, _LANE), jnp.float32),
        grid_spec=pltpu.PrefetchScalarGridSpec(
            num_scalar_prefetch=0,
            grid=(n, grid_s),
            in_specs=[
                pl.BlockSpec((1, c, tile_rows, _LANE), lambda b, s: (b, 0, s, 0)),
                pl.BlockSpec((1, c, tile_rows, _LANE), lambda b, s: (b, 0, s, 0)),
            ],
            out_specs=pl.BlockSpec((1, 3, _LANE), lambda b, s: (b, 0, 0)),
            scratch_shapes=[
                pltpu.VMEM((tile_rows, _LANE), jnp.float32),
                pltpu.VMEM((tile_rows, _LANE), jnp.float32),
                pltpu.VMEM((tile_rows, _LANE), jnp.float32),
            ],
        ),
        compiler_params=pltpu.CompilerParams(
            dimension_semantics=("parallel", "arbitrary"),
            vmem_limit_bytes=48 * 1024 * 1024,
        ),
        cost_estimate=cost,
    )(x, t)

    # Tiny scalar epilogue in the wrapper (keeps the kernel megacore-splittable).
    sums = jnp.sum(partials, axis=(0, 2))           # (3,): ce_num, tp, denom
    ce = sums[0] / jnp.float32(n * hw)
    dice = 1.0 - (2.0 * sums[1] + jnp.float32(eps)) / (sums[2] + jnp.float32(eps))
    return 0.5 * ce + 0.5 * dice


def _reference_loss(logits_nchw, target_nchw, eps=1.0):
    """Pure-JAX reference of 0.5*CE(soft targets) + 0.5*DiceLoss."""
    x = logits_nchw.astype(jnp.float32)
    t = target_nchw.astype(jnp.float32)
    logp = jax.nn.log_softmax(x, axis=1)
    ce = jnp.mean(-jnp.sum(t * logp, axis=1))
    tp = jnp.sum(t * x)
    dice = 1.0 - (2.0 * tp + eps) / (jnp.sum(x) + jnp.sum(t) + eps)
    return 0.5 * ce + 0.5 * dice


if __name__ == "__main__":
    key = jax.random.PRNGKey(0)
    k1, k2, k3, k4 = jax.random.split(key, 4)

    # Case 1: shapes implied by the PyTorch module usage (N=2, C=4, 16x16).
    N, C, H, W = 2, 4, 16, 16
    logits = jax.random.normal(k1, (N, C, H, W), dtype=jnp.float32)
    labels = jax.random.randint(k2, (N, H, W), 0, C)
    target = jnp.transpose(
        jax.nn.one_hot(labels, C, dtype=jnp.float32), (0, 3, 1, 2))

    loss = my_loss(logits, target)
    jax.block_until_ready(loss)
    ref = _reference_loss(logits, target)
    np.testing.assert_allclose(np.asarray(loss), np.asarray(ref),
                               rtol=1e-4, atol=1e-5)

    # Case 2: multi-tile spatial grid + zero-padded tail
    # (H*W = 2304 -> 18 rows of 128, tile_rows=8 -> grid_s=3, pad to 24 rows).
    N2, C2, H2, W2 = 2, 3, 48, 48
    logits2 = jax.random.normal(k3, (N2, C2, H2, W2), dtype=jnp.float32)
    labels2 = jax.random.randint(k4, (N2, H2, W2), 0, C2)
    target2 = jnp.transpose(
        jax.nn.one_hot(labels2, C2, dtype=jnp.float32), (0, 3, 1, 2))

    loss2 = my_loss(logits2, target2, tile_rows=8)
    jax.block_until_ready(loss2)
    ref2 = _reference_loss(logits2, target2)
    np.testing.assert_allclose(np.asarray(loss2), np.asarray(ref2),
                               rtol=1e-4, atol=1e-5)

    print("KERNEL_OK")
</pallas_src>

<mosaic_0001>
module attributes {stable_mosaic.version = 11 : i64} {
  func.func @_loss_kernel(%arg0: i32, %arg1: i32, %arg2: memref<1x4x8x128xf32, #tpu.memory_space<vmem>>, %arg3: memref<1x4x8x128xf32, #tpu.memory_space<vmem>>, %arg4: memref<1x3x128xf32, #tpu.memory_space<vmem>>, %arg5: memref<8x128xf32, #tpu.memory_space<vmem>>, %arg6: memref<8x128xf32, #tpu.memory_space<vmem>>, %arg7: memref<8x128xf32, #tpu.memory_space<vmem>>) attributes {dimension_semantics = [#tpu.dimension_semantics<parallel>, #tpu.dimension_semantics<arbitrary>], iteration_bounds = array<i64: 2, 1>, scalar_prefetch = 0 : i64, scratch_operands = 3 : i64, tpu.core_type = #tpu.core_type<tc>, window_params = [{transform_indices = @transform_0, window_bounds = array<i64: 1, 4, 8, 128>}, {transform_indices = @transform_1, window_bounds = array<i64: 1, 4, 8, 128>}, {transform_indices = @transform_2, window_bounds = array<i64: 1, 3, 128>}]} {
    %c0_i32 = arith.constant 0 : i32
    %0 = arith.cmpi eq, %arg1, %c0_i32 : i32
    %1 = arith.extui %0 : i1 to i32
    %c0_i32_0 = arith.constant 0 : i32
    %2 = arith.cmpi ne, %1, %c0_i32_0 : i32
    scf.if %2 {
      %cst = arith.constant 0.000000e+00 : f32
      %83 = vector.broadcast %cst : f32 to vector<8x128xf32>
      %c0_83 = arith.constant 0 : index
      %c0_84 = arith.constant 0 : index
      %84 = vector.load %arg5[%c0_83, %c0_84] : memref<8x128xf32, #tpu.memory_space<vmem>>, vector<8x128xf32>
      tpu.vector_store %arg5[%c0_83, %c0_84], %83 {strides = array<i32>} : memref<8x128xf32, #tpu.memory_space<vmem>>, vector<8x128xf32>,
      %cst_85 = arith.constant 0.000000e+00 : f32
      %85 = vector.broadcast %cst_85 : f32 to vector<8x128xf32>
      %c0_86 = arith.constant 0 : index
      %c0_87 = arith.constant 0 : index
      %86 = vector.load %arg6[%c0_86, %c0_87] : memref<8x128xf32, #tpu.memory_space<vmem>>, vector<8x128xf32>
      tpu.vector_store %arg6[%c0_86, %c0_87], %85 {strides = array<i32>} : memref<8x128xf32, #tpu.memory_space<vmem>>, vector<8x128xf32>,
      %cst_88 = arith.constant 0.000000e+00 : f32
      %87 = vector.broadcast %cst_88 : f32 to vector<8x128xf32>
      %c0_89 = arith.constant 0 : index
      %c0_90 = arith.constant 0 : index
      %88 = vector.load %arg7[%c0_89, %c0_90] : memref<8x128xf32, #tpu.memory_space<vmem>>, vector<8x128xf32>
      tpu.vector_store %arg7[%c0_89, %c0_90], %87 {strides = array<i32>} : memref<8x128xf32, #tpu.memory_space<vmem>>, vector<8x128xf32>,
    } else {
    }
    %c0 = arith.constant 0 : index
    %c0_1 = arith.constant 0 : index
    %c0_2 = arith.constant 0 : index
    %c0_3 = arith.constant 0 : index
    %3 = vector.load %arg2[%c0, %c0_1, %c0_2, %c0_3] : memref<1x4x8x128xf32, #tpu.memory_space<vmem>>, vector<1x1x8x128xf32>
    %4 = vector.shape_cast %3 : vector<1x1x8x128xf32> to vector<8x128xf32>
    %c0_4 = arith.constant 0 : index
    %c1 = arith.constant 1 : index
    %c0_5 = arith.constant 0 : index
    %c0_6 = arith.constant 0 : index
    %5 = vector.load %arg2[%c0_4, %c1, %c0_5, %c0_6] : memref<1x4x8x128xf32, #tpu.memory_space<vmem>>, vector<1x1x8x128xf32>
    %6 = vector.shape_cast %5 : vector<1x1x8x128xf32> to vector<8x128xf32>
    %7 = arith.maximumf %4, %6 : vector<8x128xf32>
    %c0_7 = arith.constant 0 : index
    %c2 = arith.constant 2 : index
    %c0_8 = arith.constant 0 : index
    %c0_9 = arith.constant 0 : index
    %8 = vector.load %arg2[%c0_7, %c2, %c0_8, %c0_9] : memref<1x4x8x128xf32, #tpu.memory_space<vmem>>, vector<1x1x8x128xf32>
    %9 = vector.shape_cast %8 : vector<1x1x8x128xf32> to vector<8x128xf32>
    %10 = arith.maximumf %7, %9 : vector<8x128xf32>
    %c0_10 = arith.constant 0 : index
    %c3 = arith.constant 3 : index
    %c0_11 = arith.constant 0 : index
    %c0_12 = arith.constant 0 : index
    %11 = vector.load %arg2[%c0_10, %c3, %c0_11, %c0_12] : memref<1x4x8x128xf32, #tpu.memory_space<vmem>>, vector<1x1x8x128xf32>
    %12 = vector.shape_cast %11 : vector<1x1x8x128xf32> to vector<8x128xf32>
    %13 = arith.maximumf %10, %12 : vector<8x128xf32>
    %c0_13 = arith.constant 0 : index
    %c0_14 = arith.constant 0 : index
    %c0_15 = arith.constant 0 : index
    %c0_16 = arith.constant 0 : index
    %14 = vector.load %arg2[%c0_13, %c0_14, %c0_15, %c0_16] : memref<1x4x8x128xf32, #tpu.memory_space<vmem>>, vector<1x1x8x128xf32>
    %15 = vector.shape_cast %14 : vector<1x1x8x128xf32> to vector<8x128xf32>
    %16 = arith.subf %15, %13 : vector<8x128xf32>
    %17 = math.exp %16 : vector<8x128xf32>
    %c0_17 = arith.constant 0 : index
    %c1_18 = arith.constant 1 : index
    %c0_19 = arith.constant 0 : index
    %c0_20 = arith.constant 0 : index
    %18 = vector.load %arg2[%c0_17, %c1_18, %c0_19, %c0_20] : memref<1x4x8x128xf32, #tpu.memory_space<vmem>>, vector<1x1x8x128xf32>
    %19 = vector.shape_cast %18 : vector<1x1x8x128xf32> to vector<8x128xf32>
    %20 = arith.subf %19, %13 : vector<8x128xf32>
    %21 = math.exp %20 : vector<8x128xf32>
    %22 = arith.addf %17, %21 : vector<8x128xf32>
    %c0_21 = arith.constant 0 : index
    %c2_22 = arith.constant 2 : index
    %c0_23 = arith.constant 0 : index
    %c0_24 = arith.constant 0 : index
    %23 = vector.load %arg2[%c0_21, %c2_22, %c0_23, %c0_24] : memref<1x4x8x128xf32, #tpu.memory_space<vmem>>, vector<1x1x8x128xf32>
    %24 = vector.shape_cast %23 : vector<1x1x8x128xf32> to vector<8x128xf32>
    %25 = arith.subf %24, %13 : vector<8x128xf32>
    %26 = math.exp %25 : vector<8x128xf32>
    %27 = arith.addf %22, %26 : vector<8x128xf32>
    %c0_25 = arith.constant 0 : index
    %c3_26 = arith.constant 3 : index
    %c0_27 = arith.constant 0 : index
    %c0_28 = arith.constant 0 : index
    %28 = vector.load %arg2[%c0_25, %c3_26, %c0_27, %c0_28] : memref<1x4x8x128xf32, #tpu.memory_space<vmem>>, vector<1x1x8x128xf32>
    %29 = vector.shape_cast %28 : vector<1x1x8x128xf32> to vector<8x128xf32>
    %30 = arith.subf %29, %13 : vector<8x128xf32>
    %31 = math.exp %30 : vector<8x128xf32>
    %32 = arith.addf %27, %31 : vector<8x128xf32>
    %33 = math.log %32 : vector<8x128xf32>
    %34 = arith.addf %13, %33 : vector<8x128xf32>
    %c0_29 = arith.constant 0 : index
    %c0_30 = arith.constant 0 : index
    %c0_31 = arith.constant 0 : index
    %c0_32 = arith.constant 0 : index
    %35 = vector.load %arg3[%c0_29, %c0_30, %c0_31, %c0_32] : memref<1x4x8x128xf32, #tpu.memory_space<vmem>>, vector<1x1x8x128xf32>
    %36 = vector.shape_cast %35 : vector<1x1x8x128xf32> to vector<8x128xf32>
    %c0_33 = arith.constant 0 : index
    %c0_34 = arith.constant 0 : index
    %c0_35 = arith.constant 0 : index
    %c0_36 = arith.constant 0 : index
    %37 = vector.load %arg2[%c0_33, %c0_34, %c0_35, %c0_36] : memref<1x4x8x128xf32, #tpu.memory_space<vmem>>, vector<1x1x8x128xf32>
    %38 = vector.shape_cast %37 : vector<1x1x8x128xf32> to vector<8x128xf32>
    %c0_37 = arith.constant 0 : index
    %c0_38 = arith.constant 0 : index
    %c0_39 = arith.constant 0 : index
    %c0_40 = arith.constant 0 : index
    %39 = vector.load %arg3[%c0_37, %c0_38, %c0_39, %c0_40] : memref<1x4x8x128xf32, #tpu.memory_space<vmem>>, vector<1x1x8x128xf32>
    %40 = vector.shape_cast %39 : vector<1x1x8x128xf32> to vector<8x128xf32>
    %c0_41 = arith.constant 0 : index
    %c0_42 = arith.constant 0 : index
    %c0_43 = arith.constant 0 : index
    %c0_44 = arith.constant 0 : index
    %41 = vector.load %arg2[%c0_41, %c0_42, %c0_43, %c0_44] : memref<1x4x8x128xf32, #tpu.memory_space<vmem>>, vector<1x1x8x128xf32>
    %42 = vector.shape_cast %41 : vector<1x1x8x128xf32> to vector<8x128xf32>
    %43 = arith.mulf %40, %42 : vector<8x128xf32>
    %c0_45 = arith.constant 0 : index
    %c1_46 = arith.constant 1 : index
    %c0_47 = arith.constant 0 : index
    %c0_48 = arith.constant 0 : index
    %44 = vector.load %arg3[%c0_45, %c1_46, %c0_47, %c0_48] : memref<1x4x8x128xf32, #tpu.memory_space<vmem>>, vector<1x1x8x128xf32>
    %45 = vector.shape_cast %44 : vector<1x1x8x128xf32> to vector<8x128xf32>
    %c0_49 = arith.constant 0 : index
    %c1_50 = arith.constant 1 : index
    %c0_51 = arith.constant 0 : index
    %c0_52 = arith.constant 0 : index
    %46 = vector.load %arg2[%c0_49, %c1_50, %c0_51, %c0_52] : memref<1x4x8x128xf32, #tpu.memory_space<vmem>>, vector<1x1x8x128xf32>
    %47 = vector.shape_cast %46 : vector<1x1x8x128xf32> to vector<8x128xf32>
    %48 = arith.addf %36, %45 : vector<8x128xf32>
    %49 = arith.addf %38, %47 : vector<8x128xf32>
    %50 = arith.mulf %45, %47 : vector<8x128xf32>
    %51 = arith.addf %43, %50 : vector<8x128xf32>
    %c0_53 = arith.constant 0 : index
    %c2_54 = arith.constant 2 : index
    %c0_55 = arith.constant 0 : index
    %c0_56 = arith.constant 0 : index
    %52 = vector.load %arg3[%c0_53, %c2_54, %c0_55, %c0_56] : memref<1x4x8x128xf32, #tpu.memory_space<vmem>>, vector<1x1x8x128xf32>
    %53 = vector.shape_cast %52 : vector<1x1x8x128xf32> to vector<8x128xf32>
    %c0_57 = arith.constant 0 : index
    %c2_58 = arith.constant 2 : index
    %c0_59 = arith.constant 0 : index
    %c0_60 = arith.constant 0 : index
    %54 = vector.load %arg2[%c0_57, %c2_58, %c0_59, %c0_60] : memref<1x4x8x128xf32, #tpu.memory_space<vmem>>, vector<1x1x8x128xf32>
    %55 = vector.shape_cast %54 : vector<1x1x8x128xf32> to vector<8x128xf32>
    %56 = arith.addf %48, %53 : vector<8x128xf32>
    %57 = arith.addf %49, %55 : vector<8x128xf32>
    %58 = arith.mulf %53, %55 : vector<8x128xf32>
    %59 = arith.addf %51, %58 : vector<8x128xf32>
    %c0_61 = arith.constant 0 : index
    %c3_62 = arith.constant 3 : index
    %c0_63 = arith.constant 0 : index
    %c0_64 = arith.constant 0 : index
    %60 = vector.load %arg3[%c0_61, %c3_62, %c0_63, %c0_64] : memref<1x4x8x128xf32, #tpu.memory_space<vmem>>, vector<1x1x8x128xf32>
    %61 = vector.shape_cast %60 : vector<1x1x8x128xf32> to vector<8x128xf32>
    %c0_65 = arith.constant 0 : index
    %c3_66 = arith.constant 3 : index
    %c0_67 = arith.constant 0 : index
    %c0_68 = arith.constant 0 : index
    %62 = vector.load %arg2[%c0_65, %c3_66, %c0_67, %c0_68] : memref<1x4x8x128xf32, #tpu.memory_space<vmem>>, vector<1x1x8x128xf32>
    %63 = vector.shape_cast %62 : vector<1x1x8x128xf32> to vector<8x128xf32>
    %64 = arith.addf %56, %61 : vector<8x128xf32>
    %65 = arith.addf %57, %63 : vector<8x128xf32>
    %66 = arith.mulf %61, %63 : vector<8x128xf32>
    %67 = arith.addf %59, %66 : vector<8x128xf32>
    %c0_69 = arith.constant 0 : index
    %c0_70 = arith.constant 0 : index
    %68 = vector.load %arg5[%c0_69, %c0_70] : memref<8x128xf32, #tpu.memory_space<vmem>>, vector<8x128xf32>
    %69 = arith.mulf %34, %64 : vector<8x128xf32>
    %70 = arith.subf %69, %67 : vector<8x128xf32>
    %71 = arith.addf %68, %70 : vector<8x128xf32>
    %c0_71 = arith.constant 0 : index
    %c0_72 = arith.constant 0 : index
    %72 = vector.load %arg5[%c0_71, %c0_72] : memref<8x128xf32, #tpu.memory_space<vmem>>, vector<8x128xf32>
    tpu.vector_store %arg5[%c0_71, %c0_72], %71 {strides = array<i32>} : memref<8x128xf32, #tpu.memory_space<vmem>>, vector<8x128xf32>,
    %c0_73 = arith.constant 0 : index
    %c0_74 = arith.constant 0 : index
    %73 = vector.load %arg6[%c0_73, %c0_74] : memref<8x128xf32, #tpu.memory_space<vmem>>, vector<8x128xf32>
    %74 = arith.addf %73, %67 : vector<8x128xf32>
    %c0_75 = arith.constant 0 : index
    %c0_76 = arith.constant 0 : index
    %75 = vector.load %arg6[%c0_75, %c0_76] : memref<8x128xf32, #tpu.memory_space<vmem>>, vector<8x128xf32>
    tpu.vector_store %arg6[%c0_75, %c0_76], %74 {strides = array<i32>} : memref<8x128xf32, #tpu.memory_space<vmem>>, vector<8x128xf32>,
    %c0_77 = arith.constant 0 : index
    %c0_78 = arith.constant 0 : index
    %76 = vector.load %arg7[%c0_77, %c0_78] : memref<8x128xf32, #tpu.memory_space<vmem>>, vector<8x128xf32>
    %77 = arith.addf %65, %64 : vector<8x128xf32>
    %78 = arith.addf %76, %77 : vector<8x128xf32>
    %c0_79 = arith.constant 0 : index
    %c0_80 = arith.constant 0 : index
    %79 = vector.load %arg7[%c0_79, %c0_80] : memref<8x128xf32, #tpu.memory_space<vmem>>, vector<8x128xf32>
    tpu.vector_store %arg7[%c0_79, %c0_80], %78 {strides = array<i32>} : memref<8x128xf32, #tpu.memory_space<vmem>>, vector<8x128xf32>,
    %c0_i32_81 = arith.constant 0 : i32
    %80 = arith.cmpi eq, %arg1, %c0_i32_81 : i32
    %81 = arith.extui %80 : i1 to i32
    %c0_i32_82 = arith.constant 0 : i32
    %82 = arith.cmpi ne, %81, %c0_i32_82 : i32
    scf.if %82 {
      %c0_83 = arith.constant 0 : index
      %c0_84 = arith.constant 0 : index
      %83 = vector.load %arg5[%c0_83, %c0_84] : memref<8x128xf32, #tpu.memory_space<vmem>>, vector<8x128xf32>
      %cst = arith.constant dense<0.000000e+00> : vector<128xf32>
      %84 = vector.multi_reduction <add>, %83, %cst [0] : vector<8x128xf32> to vector<128xf32>
      %85 = vector.shape_cast %84 : vector<128xf32> to vector<1x128xf32>
      %c0_85 = arith.constant 0 : index
      %c0_86 = arith.constant 0 : index
      %c0_87 = arith.constant 0 : index
      %86 = vector.load %arg4[%c0_85, %c0_86, %c0_87] : memref<1x3x128xf32, #tpu.memory_space<vmem>>, vector<1x1x128xf32>
      %87 = vector.shape_cast %86 : vector<1x1x128xf32> to vector<1x128xf32>
      %88 = vector.shape_cast %85 : vector<1x128xf32> to vector<1x1x128xf32>
      tpu.vector_store %arg4[%c0_85, %c0_86, %c0_87], %88 {strides = array<i32>} : memref<1x3x128xf32, #tpu.memory_space<vmem>>, vector<1x1x128xf32>,
      %c0_88 = arith.constant 0 : index
      %c0_89 = arith.constant 0 : index
      %89 = vector.load %arg6[%c0_88, %c0_89] : memref<8x128xf32, #tpu.memory_space<vmem>>, vector<8x128xf32>
      %cst_90 = arith.constant dense<0.000000e+00> : vector<128xf32>
      %90 = vector.multi_reduction <add>, %89, %cst_90 [0] : vector<8x128xf32> to vector<128xf32>
      %91 = vector.shape_cast %90 : vector<128xf32> to vector<1x128xf32>
      %c0_91 = arith.constant 0 : index
      %c1_92 = arith.constant 1 : index
      %c0_93 = arith.constant 0 : index
      %92 = vector.load %arg4[%c0_91, %c1_92, %c0_93] : memref<1x3x128xf32, #tpu.memory_space<vmem>>, vector<1x1x128xf32>
      %93 = vector.shape_cast %92 : vector<1x1x128xf32> to vector<1x128xf32>
      %94 = vector.shape_cast %91 : vector<1x128xf32> to vector<1x1x128xf32>
      tpu.vector_store %arg4[%c0_91, %c1_92, %c0_93], %94 {strides = array<i32>} : memref<1x3x128xf32, #tpu.memory_space<vmem>>, vector<1x1x128xf32>,
      %c0_94 = arith.constant 0 : index
      %c0_95 = arith.constant 0 : index
      %95 = vector.load %arg7[%c0_94, %c0_95] : memref<8x128xf32, #tpu.memory_space<vmem>>, vector<8x128xf32>
      %cst_96 = arith.constant dense<0.000000e+00> : vector<128xf32>
      %96 = vector.multi_reduction <add>, %95, %cst_96 [0] : vector<8x128xf32> to vector<128xf32>
      %97 = vector.shape_cast %96 : vector<128xf32> to vector<1x128xf32>
      %c0_97 = arith.constant 0 : index
      %c2_98 = arith.constant 2 : index
      %c0_99 = arith.constant 0 : index
      %98 = vector.load %arg4[%c0_97, %c2_98, %c0_99] : memref<1x3x128xf32, #tpu.memory_space<vmem>>, vector<1x1x128xf32>
      %99 = vector.shape_cast %98 : vector<1x1x128xf32> to vector<1x128xf32>
      %100 = vector.shape_cast %97 : vector<1x128xf32> to vector<1x1x128xf32>
      tpu.vector_store %arg4[%c0_97, %c2_98, %c0_99], %100 {strides = array<i32>} : memref<1x3x128xf32, #tpu.memory_space<vmem>>, vector<1x1x128xf32>,
    } else {
    }
    return
  }
  func.func @transform_0(%arg0: i32, %arg1: i32) -> (i32, i32, i32, i32) {
    %c0_i32 = arith.constant 0 : i32
    %c0_i32_0 = arith.constant 0 : i32
    %c0_i32_1 = arith.constant 0 : i32
    return %arg0, %c0_i32, %arg1, %c0_i32_0 : i32, i32, i32, i32
  }
  func.func @transform_1(%arg0: i32, %arg1: i32) -> (i32, i32, i32, i32) {
    %c0_i32 = arith.constant 0 : i32
    %c0_i32_0 = arith.constant 0 : i32
    %c0_i32_1 = arith.constant 0 : i32
    return %arg0, %c0_i32, %arg1, %c0_i32_0 : i32, i32, i32, i32
  }
  func.func @transform_2(%arg0: i32, %arg1: i32) -> (i32, i32, i32) {
    %c0_i32 = arith.constant 0 : i32
    %c0_i32_0 = arith.constant 0 : i32
    %c0_i32_1 = arith.constant 0 : i32
    return %arg0, %c0_i32, %c0_i32_0 : i32, i32, i32
  }
}

</mosaic_0001>

<llo_original>
// kernel: tpu_custom_call.1
$region0: #{tpu_custom_call.1}
  #allocation0 [shape = 'u32[]', space=smem, size = 0x4, offset = 0x4, fixed_abs, tag = 'smem constant byte address 0x4 - core index']
  #allocation1 [shape = 'u32[144,128]{1,0:T(1,128)}', space=vmem, size = 0x12000, scoped, tag = 'internal scratch']
  #allocation2 [shape = 'f32[8,128]{1,0:T(8,128)}', space=vmem, size = 0x1000, scoped, tag = 'scratch operand']
  #allocation3 [shape = 'f32[8,128]{1,0:T(8,128)}', space=vmem, size = 0x1000, scoped, tag = 'scratch operand']
  #allocation4 [shape = 'f32[8,128]{1,0:T(8,128)}', space=vmem, size = 0x1000, scoped, tag = 'scratch operand']
  %s0 = inlined_call_operand.hbm [shape: f32[2,4,8,128], index: 0, kind: input, shape index: {}]
  %s1 = inlined_call_operand.hbm [shape: f32[2,4,8,128], index: 1, kind: input, shape index: {}]
  %s2 = inlined_call_operand.vmem [shape: f32[2,3,128], index: 2, kind: output, shape index: {}]
  %s3 = sld [smem:[#allocation0]]
  $region57: #{tpu_custom_call.1} parent=0
    _
  %s5 = ssub.s32 1, %s3
  %s6 = scalar_select 0, %s5, %s3
  $region1: #{tpu_custom_call.1} parent=0
    #allocation5 [shape = 'u8[32768]{0}', space=vmem, size = 0x8000, scoped, tag = 'input window, operand 0']
    #allocation6 [shape = 's32[2]{0}', space=sflag, size = 0x8, scoped, tag = 'scoped memory for tpu_custom_call.1']
    #allocation7 [shape = 'u8[32768]{0}', space=vmem, size = 0x8000, scoped, tag = 'input window, operand 1']
    #allocation8 [shape = 's32[2]{0}', space=sflag, size = 0x8, scoped, tag = 'scoped memory for tpu_custom_call.1']
    %7 = vsyncpa [#allocation6], 0
    %s8 = scalar_lea.sflag [#allocation6], 1
    %9 = vsyncpa %s8, 0
    %10 = vsyncpa [#allocation8], 0
    %s11 = scalar_lea.sflag [#allocation8], 1
    %12 = vsyncpa %s11, 0
    loop: start=0, step=1, limit=4
    $region2: #{tpu_custom_call.1} parent=1 // loop_pre_header
      _
    $region3: #{tpu_custom_call.1} parent=1 // loop_header
      %s14 = sphi 0, %s18
      %p15 = scmp.ge.s32.totalorder %s14, 4
      %s21 = sphi 0, %s33
      %s22 = sphi 0, %s29
      %s23 = sphi 0, %s21
      %s24 = sphi 0, %s22
      %s25 = sphi 0, %s23
      %s26 = sphi 0, %s24
      %s38 = sphi 0, %s40
      %s41 = sphi 0, %s38
      %s42 = sphi 0, %s41
      %s58 = sphi 0, %s42
      %s66 = sphi 0, %s68
      %s69 = sphi 0, %s66
      %s70 = sphi 0, %s69
      %s86 = sphi 0, %s70
      %s92 = sphi 0, %s94
      %s95 = sphi 0, %s92
      %s96 = sphi 0, %s95
      %s112 = sphi 0, %s96
    $region4: #{tpu_custom_call.1} parent=1 // loop_header_branch
      %17 = sbr.rel (%p15) target = $region8
    $region5: #{tpu_custom_call.1} parent=1 // loop_body
      %s19 = ssub.s32 %s14, 1
      %s20 = ssub.s32 %s14, 2
      %s27 = sadd.s32 1, %s22
      %p28 = scmp.ge.s32.totalorder %s27, 1
      %s29 = scalar_select %p28, 0, %s27
      %s30 = sadd.s32 1, %s21
      %s31 = scalar_select %p28, %s30, %s21
      %p32 = scmp.ge.s32.totalorder %s31, 2
      %s33 = scalar_select %p32, 0, %s31
      %s34 = ssub.s32 %s21, %s33
      %s35 = ssub.s32 %s22, %s29
      %s36 = sor.u32 %s34, %s35
      %p37 = scmp.eq.s32.totalorder %s36, 0
      %s39 = sadd.s32 %s38, 1
      %s40 = scalar_select %p37, %s38, %s39
      %p43 = pneg %p37
      %p44 = scmp.eq.s32.totalorder %s14, 1
      %p45 = por %p43, %p44
      %p46 = scmp.ne.s32.totalorder %s38, %s41
      %p47 = scmp.eq.s32.totalorder %s14, 0
      %p48 = por %p46, %p47
      %p49 = scmp.ne.s32.totalorder %s38, %s41
      %p50 = scmp.eq.s32.totalorder %s19, 1
      %p51 = por %p49, %p50
      %p52 = scmp.ne.s32.totalorder %s41, %s42
      %p53 = scmp.eq.s32.totalorder %s19, 0
      %p54 = por %p52, %p53
      %p55 = scmp.ne.s32.totalorder %s41, %s42
      %p56 = scmp.eq.s32.totalorder %s20, 1
      %p57 = por %p55, %p56
      %p59 = scmp.ne.s32.totalorder %s42, %s58
      %p60 = scmp.eq.s32.totalorder %s20, 0
      %p61 = por %p59, %p60
      %s62 = ssub.s32 %s21, %s33
      %s63 = ssub.s32 %s22, %s29
      %s64 = sor.u32 %s62, %s63
      %p65 = scmp.eq.s32.totalorder %s64, 0
      %s67 = sadd.s32 %s66, 1
      %s68 = scalar_select %p65, %s66, %s67
      %p71 = pneg %p65
      %p72 = scmp.eq.s32.totalorder %s14, 1
      %p73 = por %p71, %p72
      %p74 = scmp.ne.s32.totalorder %s66, %s69
      %p75 = scmp.eq.s32.totalorder %s14, 0
      %p76 = por %p74, %p75
      %p77 = scmp.ne.s32.totalorder %s66, %s69
      %p78 = scmp.eq.s32.totalorder %s19, 1
      %p79 = por %p77, %p78
      %p80 = scmp.ne.s32.totalorder %s69, %s70
      %p81 = scmp.eq.s32.totalorder %s19, 0
      %p82 = por %p80, %p81
      %p83 = scmp.ne.s32.totalorder %s69, %s70
      %p84 = scmp.eq.s32.totalorder %s20, 1
      %p85 = por %p83, %p84
      %p87 = scmp.ne.s32.totalorder %s70, %s86
      %p88 = scmp.eq.s32.totalorder %s20, 0
      %p89 = por %p87, %p88
      %s90 = ssub.s32 %s21, %s33
      %p91 = scmp.eq.s32.totalorder %s90, 0
      %s93 = sadd.s32 %s92, 1
      %s94 = scalar_select %p91, %s92, %s93
      %p97 = pneg %p91
      %p98 = scmp.eq.s32.totalorder %s14, 1
      %p99 = por %p97, %p98
      %p100 = scmp.ne.s32.totalorder %s92, %s95
      %p101 = scmp.eq.s32.totalorder %s14, 0
      %p102 = por %p100, %p101
      %p103 = scmp.ne.s32.totalorder %s92, %s95
      %p104 = scmp.eq.s32.totalorder %s19, 1
      %p105 = por %p103, %p104
      %p106 = scmp.ne.s32.totalorder %s95, %s96
      %p107 = scmp.eq.s32.totalorder %s19, 0
      %p108 = por %p106, %p107
      %p109 = scmp.ne.s32.totalorder %s95, %s96
      %p110 = scmp.eq.s32.totalorder %s20, 1
      %p111 = por %p109, %p110
      %p113 = scmp.ne.s32.totalorder %s96, %s112
      %p114 = scmp.eq.s32.totalorder %s20, 0
      %p115 = por %p113, %p114
      %p116 = scmp.le.s32.totalorder 1, %s14
      %p117 = scmp.lt.s32.totalorder %s14, 3
      %p118 = pnand %p116, %p117
      %p119 = pneg %p118
      // Predicated region
      $region9: #{tpu_custom_call.1} parent=5 // pred_check
        _
      $region10: #{tpu_custom_call.1} parent=5 // pred_check_branch
        %121 = sbr.rel (%p118) target = $region12
      $region11: #{tpu_custom_call.1} parent=5 // pred_region
        %s122 = ssub.s32 %s14, 1
      $region12: #{tpu_custom_call.1} parent=5 // pred_fallthru
        _
      %p123 = scmp.lt.s32.totalorder %s14, 2
      // Predicated region
      $region13: #{tpu_custom_call.1} parent=5 // pred_check
        %p124 = pneg %p123
      $region14: #{tpu_custom_call.1} parent=5 // pred_check_branch
        %126 = sbr.rel (%p124) target = $region16
      $region15: #{tpu_custom_call.1} parent=5 // pred_region
        // Predicated region
        $region17: #{tpu_custom_call.1} parent=15 // pred_check
          %p127 = pneg %p48
        $region18: #{tpu_custom_call.1} parent=15 // pred_check_branch
          %129 = sbr.rel (%p127) target = $region20
        $region19: #{tpu_custom_call.1} parent=15 // pred_region
          %s130 = sand.u32 %s38, 1
          %s131 = scalar_lea.sflag [#allocation6], %s130
          %s132 = sand.u32 %s38, 1
          %s133 = smul.addr %s132, 32
          %s134 = scalar_lea.vmem [#allocation5], %s133
          %s136 = ssub.s32 512, 512
          %137 = vsyncadd %s131, %s136
          %s138 = smul.addr %s21, 4
          %s139 = sadd.s32 %s22, %s138
          %s140 = smul.addr %s139, 128
          %s141 = scalar_lea.hbm %s0, %s140
          %s142 = sshll.u32 %s134, 4
          %s143 = int_to_ptr.vmem [resolvable:$true] %s142
          %148 = dma.hbm_to_vmem [thread:$0]  %s141, 512, %s143, %s131, 128, 128, 8
        $region20: #{tpu_custom_call.1} parent=15 // pred_fallthru
          _
        // Predicated region
        $region21: #{tpu_custom_call.1} parent=15 // pred_check
          %p149 = pneg %p76
        $region22: #{tpu_custom_call.1} parent=15 // pred_check_branch
          %151 = sbr.rel (%p149) target = $region24
        $region23: #{tpu_custom_call.1} parent=15 // pred_region
          %s152 = sand.u32 %s66, 1
          %s153 = scalar_lea.sflag [#allocation8], %s152
          %s154 = sand.u32 %s66, 1
          %s155 = smul.addr %s154, 32
          %s156 = scalar_lea.vmem [#allocation7], %s155
          %s158 = ssub.s32 512, 512
          %159 = vsyncadd %s153, %s158
          %s160 = smul.addr %s21, 4
          %s161 = sadd.s32 %s22, %s160
          %s162 = smul.addr %s161, 128
          %s163 = scalar_lea.hbm %s1, %s162
          %s164 = sshll.u32 %s156, 4
          %s165 = int_to_ptr.vmem [resolvable:$true] %s164
          %170 = dma.hbm_to_vmem [thread:$0]  %s163, 512, %s165, %s153, 128, 128, 8
        $region24: #{tpu_custom_call.1} parent=15 // pred_fallthru
          _
      $region16: #{tpu_custom_call.1} parent=5 // pred_fallthru
        _
      %p171 = scmp.le.s32.totalorder 1, %s14
      %p172 = scmp.lt.s32.totalorder %s14, 3
      %p173 = pnand %p171, %p172
      %p174 = pneg %p173
      // Predicated region
      $region25: #{tpu_custom_call.1} parent=5 // pred_check
        _
      $region26: #{tpu_custom_call.1} parent=5 // pred_check_branch
        %176 = sbr.rel (%p173) target = $region28
      $region27: #{tpu_custom_call.1} parent=5 // pred_region
        %s177 = ssub.s32 %s14, 1
        %s178 = sand.u32 %s41, 1
        %s179 = scalar_lea.sflag [#allocation6], %s178
        %s180 = sand.u32 %s41, 1
        %s181 = smul.addr %s180, 32
        %s182 = scalar_lea.vmem [#allocation5], %s181
        // Predicated region
        $region29: #{tpu_custom_call.1} parent=27 // pred_check
          %p183 = pneg %p54
        $region30: #{tpu_custom_call.1} parent=27 // pred_check_branch
          %185 = sbr.rel (%p183) target = $region32
        $region31: #{tpu_custom_call.1} parent=27 // pred_region
          %186 = dma.done %s179, 512
        $region32: #{tpu_custom_call.1} parent=27 // pred_fallthru
          _
        %s187 = sand.u32 %s69, 1
        %s188 = scalar_lea.sflag [#allocation8], %s187
        %s189 = sand.u32 %s69, 1
        %s190 = smul.addr %s189, 32
        %s191 = scalar_lea.vmem [#allocation7], %s190
        // Predicated region
        $region33: #{tpu_custom_call.1} parent=27 // pred_check
          %p192 = pneg %p82
        $region34: #{tpu_custom_call.1} parent=27 // pred_check_branch
          %194 = sbr.rel (%p192) target = $region36
        $region35: #{tpu_custom_call.1} parent=27 // pred_region
          %195 = dma.done %s188, 512
        $region36: #{tpu_custom_call.1} parent=27 // pred_fallthru
          _
        %s196 = sand.u32 %s41, 1
        %s197 = scalar_lea.sflag [#allocation6], %s196
        %s198 = sand.u32 %s41, 1
        %s199 = smul.addr %s198, 32
        %s200 = scalar_lea.vmem [#allocation5], %s199
        %p201 = pneg %p54
        %p202 = pneg %p51
        %s203 = sand.u32 %s69, 1
        %s204 = scalar_lea.sflag [#allocation8], %s203
        %s205 = sand.u32 %s69, 1
        %s206 = smul.addr %s205, 32
        %s207 = scalar_lea.vmem [#allocation7], %s206
        %p208 = pneg %p82
        %p209 = pneg %p79
        %p210 = pneg %p108
        %p211 = pneg %p105
        %p212 = scmp.lt.s32.totalorder %s23, 1
        %s213 = scalar_select %p212, %s23, 1
        %s214 = smul.addr %s213, 4
        %s215 = scalar_lea.vmem %s2, %s214
        %p216 = scmp.lt.s32.totalorder %s23, 1
        %s217 = scalar_select %p216, %s23, 1
        %s218 = smul.addr %s217, 4
        %s219 = scalar_lea.vmem %s2, %s218
        %p220 = scmp.eq.s32.totalorder %s24, 0
        // Predicated region
        $region37: #{tpu_custom_call.1} parent=27 // pred_check
          %p221 = pneg %p220
        $region38: #{tpu_custom_call.1} parent=27 // pred_check_branch
          %223 = sbr.rel (%p221) target = $region40
        $region39: #{tpu_custom_call.1} parent=27 // pred_region
          %224 = vst [vmem:[#allocation2] sm:$0xff] 0.0
          %225 = vst [vmem:[#allocation3] sm:$0xff] 0.0
          %226 = vst [vmem:[#allocation4] sm:$0xff] 0.0
        $region40: #{tpu_custom_call.1} parent=27 // pred_fallthru
          _
        %v227 = vld [vmem:[%s182] sm:$0xff]
        %s228 = scalar_lea.vmem %s182, 8 [#allocation5]
        %v229 = vld [vmem:[%s228] sm:$0xff]
        %v230 = vmax.f32 %v227, %v229
        %s231 = scalar_lea.vmem %s182, 16 [#allocation5]
        %v232 = vld [vmem:[%s231] sm:$0xff]
        %v233 = vmax.f32 %v230, %v232
        %s234 = scalar_lea.vmem %s182, 24 [#allocation5]
        %v235 = vld [vmem:[%s234] sm:$0xff]
        %v236 = vmax.f32 %v233, %v235
        %v237 = vsub.f32 %v227, %v236
        %v238 = vmul.f32 %v237, 1.442695
        %v239 = vpow.pop %v238
        %v240 = vsub.f32 %v229, %v236
        %v241 = vmul.f32 %v240, 1.442695
        %v242 = vpow.pop %v241
        %v243 = vadd.f32 %v239, %v242
        %v244 = vsub.f32 %v232, %v236
        %v245 = vmul.f32 %v244, 1.442695
        %v246 = vpow.pop %v245
        %v247 = vadd.f32 %v243, %v246
        %v248 = vsub.f32 %v235, %v236
        %v249 = vmul.f32 %v248, 1.442695
        %v250 = vpow.pop %v249
        %v251 = vadd.f32 %v247, %v250
        %v252 = vlog2.pop %v251
        %v253 = vmul.f32 %v252, 0.6931472
        %v254 = vadd.f32 %v236, %v253
        %v255 = vld [vmem:[%s191] sm:$0xff]
        %v256 = vmul.f32 %v255, %v227
        %s257 = scalar_lea.vmem %s191, 8 [#allocation7]
        %v258 = vld [vmem:[%s257] sm:$0xff]
        %v259 = vadd.f32 %v255, %v258
        %v260 = vadd.f32 %v227, %v229
        %v261 = vmul.f32 %v258, %v229
        %v262 = vadd.f32 %v256, %v261
        %s263 = scalar_lea.vmem %s191, 16 [#allocation7]
        %v264 = vld [vmem:[%s263] sm:$0xff]
        %v265 = vadd.f32 %v259, %v264
        %v266 = vadd.f32 %v260, %v232
        %v267 = vmul.f32 %v264, %v232
        %v268 = vadd.f32 %v262, %v267
        %s269 = scalar_lea.vmem %s191, 24 [#allocation7]
        %v270 = vld [vmem:[%s269] sm:$0xff]
        %v271 = vadd.f32 %v265, %v270
        %v272 = vadd.f32 %v266, %v235
        %v273 = vmul.f32 %v270, %v235
        %v274 = vadd.f32 %v268, %v273
        %v275 = vld [vmem:[#allocation2] sm:$0xff]
        %v276 = vmul.f32 %v254, %v271
        %v277 = vsub.f32 %v276, %v274
        %v278 = vadd.f32 %v275, %v277
        %279 = vst [vmem:[#allocation2] sm:$0xff] %v278
        %v280 = vld [vmem:[#allocation3] sm:$0xff]
        %v281 = vadd.f32 %v280, %v274
        %282 = vst [vmem:[#allocation3] sm:$0xff] %v281
        %v283 = vld [vmem:[#allocation4] sm:$0xff]
        %v284 = vadd.f32 %v272, %v271
        %v285 = vadd.f32 %v283, %v284
        %286 = vst [vmem:[#allocation4] sm:$0xff] %v285
        // Predicated region
        $region41: #{tpu_custom_call.1} parent=27 // pred_check
          %p287 = pneg %p220
        $region42: #{tpu_custom_call.1} parent=27 // pred_check_branch
          %289 = sbr.rel (%p287) target = $region44
        $region43: #{tpu_custom_call.1} parent=27 // pred_region
          %v290 = vld [vmem:[#allocation2] sm:$0xff]
          %v291 = vrot.slane %v290, 4
          %v292 = vadd.f32 %v290, %v291
          %v293 = vrot.slane %v292, 2
          %v294 = vadd.f32 %v292, %v293
          %v295 = vrot.slane %v294, 1
          %v296 = vadd.f32 %v294, %v295
          %297 = vst [vmem:[%s219] sm:$0x1] %v296
          %v298 = vld [vmem:[#allocation3] sm:$0xff]
          %v299 = vrot.slane %v298, 4
          %v300 = vadd.f32 %v298, %v299
          %v301 = vrot.slane %v300, 2
          %v302 = vadd.f32 %v300, %v301
          %v303 = vrot.slane %v302, 1
          %v304 = vadd.f32 %v302, %v303
          %305 = vst [vmem:[%s219 + $0x1] sm:$0x1] %v304
          %v306 = vld [vmem:[#allocation4] sm:$0xff]
          %v307 = vrot.slane %v306, 4
          %v308 = vadd.f32 %v306, %v307
          %v309 = vrot.slane %v308, 2
          %v310 = vadd.f32 %v308, %v309
          %v311 = vrot.slane %v310, 1
          %v312 = vadd.f32 %v310, %v311
          %313 = vst [vmem:[%s219 + $0x2] sm:$0x1] %v312
        $region44: #{tpu_custom_call.1} parent=27 // pred_fallthru
          _
        %p314 = scmp.lt.s32.totalorder %s23, 1
        %s315 = scalar_select %p314, %s23, 1
        %s316 = smul.addr %s315, 4
        %s317 = scalar_lea.vmem %s2, %s316
        // Predicated region
        $region45: #{tpu_custom_call.1} parent=27 // pred_check
          %p318 = pneg %p105
        $region46: #{tpu_custom_call.1} parent=27 // pred_check_branch
          %320 = sbr.rel (%p318) target = $region48
        $region47: #{tpu_custom_call.1} parent=27 // pred_region
          _
        $region48: #{tpu_custom_call.1} parent=27 // pred_fallthru
          _
      $region28: #{tpu_custom_call.1} parent=5 // pred_fallthru
        _
      %p321 = scmp.le.s32.totalorder 2, %s14
      // Predicated region
      $region49: #{tpu_custom_call.1} parent=5 // pred_check
        %p322 = pneg %p321
      $region50: #{tpu_custom_call.1} parent=5 // pred_check_branch
        %324 = sbr.rel (%p322) target = $region52
      $region51: #{tpu_custom_call.1} parent=5 // pred_region
        %s325 = ssub.s32 %s14, 2
        // Predicated region
        $region53: #{tpu_custom_call.1} parent=51 // pred_check
          %p326 = pneg %p111
        $region54: #{tpu_custom_call.1} parent=51 // pred_check_branch
          %328 = sbr.rel (%p326) target = $region56
        $region55: #{tpu_custom_call.1} parent=51 // pred_region
          %p329 = scmp.lt.s32.totalorder %s25, 1
          %s330 = scalar_select %p329, %s25, 1
          %s331 = smul.addr %s330, 4
          %s332 = scalar_lea.vmem %s2, %s331
        $region56: #{tpu_custom_call.1} parent=51 // pred_fallthru
          _
      $region52: #{tpu_custom_call.1} parent=5 // pred_fallthru
        _
    $region6: #{tpu_custom_call.1} parent=1 // loop_footer
      %s18 = sadd.s32 1, %s14
    $region7: #{tpu_custom_call.1} parent=1 // loop_footer_branch
      %13 = sbr.rel target = $region3
    $region8: #{tpu_custom_call.1} parent=1 // loop_exit
      _
    %333 = vsyncpa [#allocation6], 1
    %s334 = scalar_lea.sflag [#allocation6], 1
    %335 = vsyncpa %s334, 1
    %336 = vsyncpa [#allocation8], 1
    %s337 = scalar_lea.sflag [#allocation8], 1
    %338 = vsyncpa %s337, 1

</llo_original>
